<compile_context>
chip_gen: v7x
topology: tpu7x:2x2x1
jax: 0.10.0
libtpu: 0.0.40
codegen_flags: <defaults>
</compile_context>

<pallas_src>
import jax
import jax.numpy as jnp
from jax.experimental import pallas as pl
from jax.experimental.pallas import tpu as pltpu

VOCAB_SIZE = 128
EMBEDDING_DIM = 16
CONTEXT_SIZE = 2
HIDDEN = 128
IN_FEATURES = CONTEXT_SIZE * EMBEDDING_DIM   # 32

MAX_TILE_B = 128   # MXU-native M tile (128 is a clean tile on v5e/v6e/v7x)


def _round_up(x, m):
    return ((x + m - 1) // m) * m


def ngram_kernel(ids_ref, t_ref, b1_ref, w2t_ref, b2_ref, out_ref):
    """One grid step: TILE_B contexts -> TILE_B rows of log-probs.

    ids_ref : (TILE_B, CONTEXT_SIZE) int32 VMEM — token ids for this tile
    t_ref   : (CONTEXT_SIZE, VOCAB, HIDDEN) bf16 — folded emb @ W1 tables (resident)
    b1_ref  : (1, HIDDEN) f32 (resident)
    w2t_ref : (HIDDEN, VOCAB) bf16 (resident)
    b2_ref  : (1, VOCAB) f32 (resident)
    out_ref : (TILE_B, VOCAB) f32 — output tile (lane-dense, VOCAB=128)
    """
    tile_b = out_ref.shape[0]
    ids = ids_ref[...]                                  # (TILE_B, CONTEXT_SIZE)

    # Fused "embedding lookup + linear1" as one-hot MXU matmuls:
    #   h = sum_c onehot(ids[:, c]) @ T_c  + b1
    lane_iota = jax.lax.broadcasted_iota(jnp.int32, (tile_b, VOCAB_SIZE), 1)
    acc = jnp.zeros((tile_b, HIDDEN), jnp.float32)
    for c in range(CONTEXT_SIZE):                       # static, unrolled (=2)
        onehot = (lane_iota == ids[:, c:c + 1]).astype(jnp.bfloat16)
        acc = acc + jnp.dot(onehot, t_ref[c],
                            preferred_element_type=jnp.float32)

    # ReLU (f32 VPU)
    h = jnp.maximum(acc + b1_ref[...], 0.0)

    # linear2: bf16 operands on the MXU, f32 accumulation.
    logits = jnp.dot(h.astype(jnp.bfloat16), w2t_ref[...],
                     preferred_element_type=jnp.float32) + b2_ref[...]

    # log_softmax along last dim (numerically stable, all f32).
    m = jnp.max(logits, axis=1, keepdims=True)
    s = logits - m
    lse = jnp.log(jnp.sum(jnp.exp(s), axis=1, keepdims=True))
    out_ref[...] = s - lse


@jax.jit
def ngram_forward(inputs, t_emb, b1r, w2t, b2r):
    """Batched forward: inputs (B, CONTEXT_SIZE) int32 -> (B, VOCAB) log-probs."""
    batch = inputs.shape[0]

    # Pick the batch tile: MXU-native 128 rows, shrunk (to a sublane multiple)
    # for small batches so the demo isn't padded 8x.
    tile_b = min(MAX_TILE_B, _round_up(batch, 8))
    padded = _round_up(batch, tile_b)
    if padded != batch:
        # Padded rows use token id 0 (valid) and are sliced off afterwards.
        inputs = jnp.pad(inputs, ((0, padded - batch), (0, 0)))

    grid_spec = pltpu.PrefetchScalarGridSpec(
        num_scalar_prefetch=0,
        grid=(padded // tile_b,),
        in_specs=[
            # Token ids: streamed per batch tile.
            pl.BlockSpec((tile_b, CONTEXT_SIZE), lambda i: (i, 0)),
            # Parameters: resident in VMEM across the whole grid.
            pl.BlockSpec((CONTEXT_SIZE, VOCAB_SIZE, HIDDEN),
                         lambda i: (0, 0, 0)),
            pl.BlockSpec((1, HIDDEN), lambda i: (0, 0)),
            pl.BlockSpec((HIDDEN, VOCAB_SIZE), lambda i: (0, 0)),
            pl.BlockSpec((1, VOCAB_SIZE), lambda i: (0, 0)),
        ],
        out_specs=pl.BlockSpec((tile_b, VOCAB_SIZE), lambda i: (i, 0)),
    )
    out = pl.pallas_call(
        ngram_kernel,
        out_shape=jax.ShapeDtypeStruct((padded, VOCAB_SIZE), jnp.float32),
        grid_spec=grid_spec,
        compiler_params=pltpu.CompilerParams(
            dimension_semantics=("parallel",)),   # v7x: shard batch across TCs
    )(inputs, t_emb, b1r, w2t, b2r)
    return out[:batch]


def make_params(key):
    """Create PyTorch-layout params and prepare kernel layouts ONCE (hoisted)."""
    k_emb, k_w1, k_b1, k_w2, k_b2 = jax.random.split(key, 5)
    emb = jax.random.normal(k_emb, (VOCAB_SIZE, EMBEDDING_DIM), jnp.float32)
    # nn.Linear weight layout: (out_features, in_features)
    w1 = jax.random.normal(k_w1, (HIDDEN, IN_FEATURES), jnp.float32) / jnp.sqrt(IN_FEATURES)
    b1 = jax.random.normal(k_b1, (HIDDEN,), jnp.float32) * 0.01
    w2 = jax.random.normal(k_w2, (VOCAB_SIZE, HIDDEN), jnp.float32) / jnp.sqrt(HIDDEN)
    b2 = jax.random.normal(k_b2, (VOCAB_SIZE,), jnp.float32) * 0.01

    # One-time layout prep (NOT in the per-forward path):
    # Fold embedding into linear1:  T_c = emb @ W1^T[c*E:(c+1)*E, :]
    w1t = jnp.transpose(w1)                              # (IN_FEATURES, HIDDEN)
    t_emb = jnp.stack(
        [emb @ w1t[c * EMBEDDING_DIM:(c + 1) * EMBEDDING_DIM, :]
         for c in range(CONTEXT_SIZE)],
        axis=0).astype(jnp.bfloat16)                     # (CTX, VOCAB, HIDDEN)
    w2t = jnp.transpose(w2).astype(jnp.bfloat16)         # (HIDDEN, VOCAB)
    b1r = b1.reshape(1, HIDDEN)
    b2r = b2.reshape(1, VOCAB_SIZE)
    return t_emb, b1r, w2t, b2r


def ngram_reference(inputs, t_emb, b1r, w2t, b2r):
    """Pure-JAX reference with the same folded-table / bf16-operand math."""
    h = (t_emb[0][inputs[:, 0]].astype(jnp.float32)
         + t_emb[1][inputs[:, 1]].astype(jnp.float32) + b1r)
    h = jnp.maximum(h, 0.0)
    logits = jnp.dot(h.astype(jnp.bfloat16), w2t,
                     preferred_element_type=jnp.float32) + b2r
    return jax.nn.log_softmax(logits, axis=1)


if __name__ == "__main__":
    key = jax.random.PRNGKey(0)
    param_key, idx_key = jax.random.split(key)
    t_emb, b1r, w2t, b2r = make_params(param_key)

    # A batch of contexts (each row = CONTEXT_SIZE word indices).
    batch = 16
    inputs = jax.random.randint(idx_key, (batch, CONTEXT_SIZE),
                                0, VOCAB_SIZE, dtype=jnp.int32)

    log_probs = ngram_forward(inputs, t_emb, b1r, w2t, b2r)
    log_probs = jax.block_until_ready(log_probs)

    # Sanity: shape, per-row probabilities sum to ~1, matches JAX reference.
    assert log_probs.shape == (batch, VOCAB_SIZE)
    row_sums = jnp.sum(jnp.exp(log_probs), axis=1)
    assert bool(jnp.all(jnp.abs(row_sums - 1.0) < 1e-3)), row_sums

    ref = ngram_reference(inputs, t_emb, b1r, w2t, b2r)
    assert bool(jnp.allclose(log_probs, ref, atol=1e-2, rtol=1e-2)), (
        float(jnp.max(jnp.abs(log_probs - ref))))

    print("KERNEL_OK")
</pallas_src>

<mosaic_0001>
module attributes {stable_mosaic.version = 11 : i64} {
  func.func @ngram_kernel(%arg0: i32, %arg1: memref<16x2xi32, #tpu.memory_space<vmem>>, %arg2: memref<2x128x128xbf16, #tpu.memory_space<vmem>>, %arg3: memref<1x128xf32, #tpu.memory_space<vmem>>, %arg4: memref<128x128xbf16, #tpu.memory_space<vmem>>, %arg5: memref<1x128xf32, #tpu.memory_space<vmem>>, %arg6: memref<16x128xf32, #tpu.memory_space<vmem>>) attributes {dimension_semantics = [#tpu.dimension_semantics<parallel>], iteration_bounds = array<i64: 1>, scalar_prefetch = 0 : i64, scratch_operands = 0 : i64, tpu.core_type = #tpu.core_type<tc>, window_params = [{transform_indices = @transform_0, window_bounds = array<i64: 16, 2>}, {pipeline_mode = #tpu.pipeline_mode<synchronous>, transform_indices = @transform_1, window_bounds = array<i64: 2, 128, 128>}, {pipeline_mode = #tpu.pipeline_mode<synchronous>, transform_indices = @transform_2, window_bounds = array<i64: 1, 128>}, {pipeline_mode = #tpu.pipeline_mode<synchronous>, transform_indices = @transform_3, window_bounds = array<i64: 128, 128>}, {pipeline_mode = #tpu.pipeline_mode<synchronous>, transform_indices = @transform_4, window_bounds = array<i64: 1, 128>}, {transform_indices = @transform_5, window_bounds = array<i64: 16, 128>}]} {
    %c0 = arith.constant 0 : index
    %c0_0 = arith.constant 0 : index
    %0 = vector.load %arg1[%c0, %c0_0] : memref<16x2xi32, #tpu.memory_space<vmem>>, vector<16x2xi32>
    %1 = tpu.iota {dimensions = array<i32: 1>} : vector<16x128xi32>
    %cst = arith.constant 0.000000e+00 : f32
    %2 = vector.broadcast %cst : f32 to vector<16x128xf32>
    %3 = vector.extract_strided_slice %0 {offsets = [0, 0], sizes = [16, 1], strides = [1, 1]} : vector<16x2xi32> to vector<16x1xi32>
    %4 = vector.broadcast %3 : vector<16x1xi32> to vector<16x128xi32>
    %5 = arith.cmpi eq, %1, %4 : vector<16x128xi32>
    %6 = arith.extui %5 : vector<16x128xi1> to vector<16x128xi32>
    %7 = arith.sitofp %6 : vector<16x128xi32> to vector<16x128xf32>
    %8 = arith.truncf %7 : vector<16x128xf32> to vector<16x128xbf16>
    %c0_1 = arith.constant 0 : index
    %c0_2 = arith.constant 0 : index
    %c0_3 = arith.constant 0 : index
    %9 = vector.load %arg2[%c0_1, %c0_2, %c0_3] : memref<2x128x128xbf16, #tpu.memory_space<vmem>>, vector<1x128x128xbf16>
    %10 = vector.shape_cast %9 : vector<1x128x128xbf16> to vector<128x128xbf16>
    %cst_4 = arith.constant dense<0.000000e+00> : vector<16x128xf32>
    %11 = tpu.matmul %8, %10, %cst_4 {dimension_numbers = #tpu.dot_dimension_numbers<[1], [0], [0], [1], [0, 0, 1, 1], [], []>} : vector<16x128xbf16>, vector<128x128xbf16>, vector<16x128xf32> -> vector<16x128xf32>
    %12 = arith.addf %2, %11 : vector<16x128xf32>
    %13 = vector.extract_strided_slice %0 {offsets = [0, 1], sizes = [16, 1], strides = [1, 1]} : vector<16x2xi32> to vector<16x1xi32>
    %14 = vector.broadcast %13 : vector<16x1xi32> to vector<16x128xi32>
    %15 = arith.cmpi eq, %1, %14 : vector<16x128xi32>
    %16 = arith.extui %15 : vector<16x128xi1> to vector<16x128xi32>
    %17 = arith.sitofp %16 : vector<16x128xi32> to vector<16x128xf32>
    %18 = arith.truncf %17 : vector<16x128xf32> to vector<16x128xbf16>
    %c1 = arith.constant 1 : index
    %c0_5 = arith.constant 0 : index
    %c0_6 = arith.constant 0 : index
    %19 = vector.load %arg2[%c1, %c0_5, %c0_6] : memref<2x128x128xbf16, #tpu.memory_space<vmem>>, vector<1x128x128xbf16>
    %20 = vector.shape_cast %19 : vector<1x128x128xbf16> to vector<128x128xbf16>
    %cst_7 = arith.constant dense<0.000000e+00> : vector<16x128xf32>
    %21 = tpu.matmul %18, %20, %cst_7 {dimension_numbers = #tpu.dot_dimension_numbers<[1], [0], [0], [1], [0, 0, 1, 1], [], []>} : vector<16x128xbf16>, vector<128x128xbf16>, vector<16x128xf32> -> vector<16x128xf32>
    %22 = arith.addf %12, %21 : vector<16x128xf32>
    %c0_8 = arith.constant 0 : index
    %c0_9 = arith.constant 0 : index
    %23 = vector.load %arg3[%c0_8, %c0_9] : memref<1x128xf32, #tpu.memory_space<vmem>>, vector<1x128xf32>
    %24 = vector.broadcast %23 : vector<1x128xf32> to vector<16x128xf32>
    %25 = arith.addf %22, %24 : vector<16x128xf32>
    %cst_10 = arith.constant 0.000000e+00 : f32
    %26 = vector.broadcast %cst_10 : f32 to vector<16x128xf32>
    %27 = arith.maximumf %25, %26 : vector<16x128xf32>
    %28 = arith.truncf %27 : vector<16x128xf32> to vector<16x128xbf16>
    %c0_11 = arith.constant 0 : index
    %c0_12 = arith.constant 0 : index
    %29 = vector.load %arg4[%c0_11, %c0_12] : memref<128x128xbf16, #tpu.memory_space<vmem>>, vector<128x128xbf16>
    %cst_13 = arith.constant dense<0.000000e+00> : vector<16x128xf32>
    %30 = tpu.matmul %28, %29, %cst_13 {dimension_numbers = #tpu.dot_dimension_numbers<[1], [0], [0], [1], [0, 0, 1, 1], [], []>} : vector<16x128xbf16>, vector<128x128xbf16>, vector<16x128xf32> -> vector<16x128xf32>
    %c0_14 = arith.constant 0 : index
    %c0_15 = arith.constant 0 : index
    %31 = vector.load %arg5[%c0_14, %c0_15] : memref<1x128xf32, #tpu.memory_space<vmem>>, vector<1x128xf32>
    %32 = vector.broadcast %31 : vector<1x128xf32> to vector<16x128xf32>
    %33 = arith.addf %30, %32 : vector<16x128xf32>
    %cst_16 = arith.constant dense<0xFF800000> : vector<16xf32>
    %34 = vector.multi_reduction <maximumf>, %33, %cst_16 [1] : vector<16x128xf32> to vector<16xf32>
    %35 = vector.shape_cast %34 : vector<16xf32> to vector<16x1xf32>
    %36 = vector.broadcast %35 : vector<16x1xf32> to vector<16x128xf32>
    %37 = arith.subf %33, %36 : vector<16x128xf32>
    %38 = math.exp %37 : vector<16x128xf32>
    %cst_17 = arith.constant dense<0.000000e+00> : vector<16xf32>
    %39 = vector.multi_reduction <add>, %38, %cst_17 [1] : vector<16x128xf32> to vector<16xf32>
    %40 = vector.shape_cast %39 : vector<16xf32> to vector<16x1xf32>
    %41 = math.log %40 : vector<16x1xf32>
    %42 = vector.broadcast %41 : vector<16x1xf32> to vector<16x128xf32>
    %43 = arith.subf %37, %42 : vector<16x128xf32>
    %c0_18 = arith.constant 0 : index
    %c0_19 = arith.constant 0 : index
    %44 = vector.load %arg6[%c0_18, %c0_19] : memref<16x128xf32, #tpu.memory_space<vmem>>, vector<16x128xf32>
    tpu.vector_store %arg6[%c0_18, %c0_19], %43 {strides = array<i32>} : memref<16x128xf32, #tpu.memory_space<vmem>>, vector<16x128xf32>,
    return
  }
  func.func @transform_0(%arg0: i32) -> (i32, i32) {
    %c0_i32 = arith.constant 0 : i32
    %c0_i32_0 = arith.constant 0 : i32
    return %arg0, %c0_i32 : i32, i32
  }
  func.func @transform_1(%arg0: i32) -> (i32, i32, i32) {
    %c0_i32 = arith.constant 0 : i32
    %c0_i32_0 = arith.constant 0 : i32
    %c0_i32_1 = arith.constant 0 : i32
    %c0_i32_2 = arith.constant 0 : i32
    return %c0_i32, %c0_i32_0, %c0_i32_1 : i32, i32, i32
  }
  func.func @transform_2(%arg0: i32) -> (i32, i32) {
    %c0_i32 = arith.constant 0 : i32
    %c0_i32_0 = arith.constant 0 : i32
    %c0_i32_1 = arith.constant 0 : i32
    return %c0_i32, %c0_i32_0 : i32, i32
  }
  func.func @transform_3(%arg0: i32) -> (i32, i32) {
    %c0_i32 = arith.constant 0 : i32
    %c0_i32_0 = arith.constant 0 : i32
    %c0_i32_1 = arith.constant 0 : i32
    return %c0_i32, %c0_i32_0 : i32, i32
  }
  func.func @transform_4(%arg0: i32) -> (i32, i32) {
    %c0_i32 = arith.constant 0 : i32
    %c0_i32_0 = arith.constant 0 : i32
    %c0_i32_1 = arith.constant 0 : i32
    return %c0_i32, %c0_i32_0 : i32, i32
  }
  func.func @transform_5(%arg0: i32) -> (i32, i32) {
    %c0_i32 = arith.constant 0 : i32
    %c0_i32_0 = arith.constant 0 : i32
    return %arg0, %c0_i32 : i32, i32
  }
}

</mosaic_0001>

<llo_original>
// kernel: ngram_forward.1
$region0: #{ngram_forward.1}
  #allocation0 [shape = 'u32[]', space=smem, size = 0x4, offset = 0x4, fixed_abs, tag = 'smem constant byte address 0x4 - core index']
  #allocation1 [shape = 'u32[144,128]{1,0:T(1,128)}', space=vmem, size = 0x12000, scoped, tag = 'internal scratch']
  %s0 = inlined_call_operand.vmem [shape: s32[16,2], index: 0, kind: input, shape index: {}]
  %s1 = inlined_call_operand.hbm [shape: bf16[2,128,128], index: 1, kind: input, shape index: {}]
  %s2 = inlined_call_operand.vmem [shape: f32[1,128], index: 2, kind: input, shape index: {}]
  %s3 = inlined_call_operand.hbm [shape: bf16[128,128], index: 3, kind: input, shape index: {}]
  %s4 = inlined_call_operand.vmem [shape: f32[1,128], index: 4, kind: input, shape index: {}]
  %s5 = inlined_call_operand.hbm [shape: f32[16,128], index: 5, kind: output, shape index: {}]
  %s6 = sld [smem:[#allocation0]]
  $region38: #{ngram_forward.1} parent=0
    _
  %s8 = ssub.s32 1, %s6
  %s9 = scalar_select 0, %s8, %s6
  $region1: #{ngram_forward.1} parent=0
    #allocation2 [shape = 'u8[65536]{0}', space=vmem, size = 0x10000, scoped, tag = 'input window, operand 1, single buffered']
    #allocation3 [shape = 's32[1]{0}', space=sflag, size = 0x4, scoped, tag = 'scoped memory for ngram_forward.1']
    #allocation4 [shape = 's32[1]{0}', space=sflag, size = 0x4, scoped, tag = 'scoped memory for ngram_forward.1']
    #allocation5 [shape = 'u8[32768]{0}', space=vmem, size = 0x8000, scoped, tag = 'input window, operand 3, single buffered']
    #allocation6 [shape = 's32[1]{0}', space=sflag, size = 0x4, scoped, tag = 'scoped memory for ngram_forward.1']
    #allocation7 [shape = 'u8[8192]{0}', space=vmem, size = 0x2000, scoped, tag = 'output window, operand 0, single buffered']
    %10 = vsyncpa [#allocation3], 0
    %11 = vsyncpa [#allocation6], 0
    %12 = vsyncpa [#allocation4], 0
    // Predicated region
    $region2: #{ngram_forward.1} parent=1 // pred_check
      _
    $region3: #{ngram_forward.1} parent=1 // pred_check_branch
      %14 = sbr.rel (0) target = $region5
    $region4: #{ngram_forward.1} parent=1 // pred_region
      _
    $region5: #{ngram_forward.1} parent=1 // pred_fallthru
      _
    // Predicated region
    $region6: #{ngram_forward.1} parent=1 // pred_check
      _
    $region7: #{ngram_forward.1} parent=1 // pred_check_branch
      %16 = sbr.rel (0) target = $region9
    $region8: #{ngram_forward.1} parent=1 // pred_region
      %s18 = ssub.s32 2048, 2048
      %19 = vsyncadd [#allocation3], %s18
      %s20 = sshll.u32 [#allocation2], 4
      %s21 = int_to_ptr.vmem [resolvable:$true] %s20
      %26 = dma.hbm_to_vmem [thread:$0]  %s1, 2048, %s21, [#allocation3], 64, 64, 4
    $region9: #{ngram_forward.1} parent=1 // pred_fallthru
      _
    // Predicated region
    $region10: #{ngram_forward.1} parent=1 // pred_check
      _
    $region11: #{ngram_forward.1} parent=1 // pred_check_branch
      %28 = sbr.rel (0) target = $region13
    $region12: #{ngram_forward.1} parent=1 // pred_region
      _
    $region13: #{ngram_forward.1} parent=1 // pred_fallthru
      _
    // Predicated region
    $region14: #{ngram_forward.1} parent=1 // pred_check
      _
    $region15: #{ngram_forward.1} parent=1 // pred_check_branch
      %30 = sbr.rel (0) target = $region17
    $region16: #{ngram_forward.1} parent=1 // pred_region
      %s32 = ssub.s32 1024, 1024
      %33 = vsyncadd [#allocation6], %s32
      %s34 = sshll.u32 [#allocation5], 4
      %s35 = int_to_ptr.vmem [resolvable:$true] %s34
      %40 = dma.hbm_to_vmem [thread:$0]  %s3, 1024, %s35, [#allocation6], 64, 64, 4
    $region17: #{ngram_forward.1} parent=1 // pred_fallthru
      _
    // Predicated region
    $region18: #{ngram_forward.1} parent=1 // pred_check
      _
    $region19: #{ngram_forward.1} parent=1 // pred_check_branch
      %42 = sbr.rel (0) target = $region21
    $region20: #{ngram_forward.1} parent=1 // pred_region
      _
    $region21: #{ngram_forward.1} parent=1 // pred_fallthru
      _
    // Predicated region
    $region22: #{ngram_forward.1} parent=1 // pred_check
      _
    $region23: #{ngram_forward.1} parent=1 // pred_check_branch
      %44 = sbr.rel (0) target = $region25
    $region24: #{ngram_forward.1} parent=1 // pred_region
      %45 = dma.done [#allocation3], 2048
    $region25: #{ngram_forward.1} parent=1 // pred_fallthru
      _
    // Predicated region
    $region26: #{ngram_forward.1} parent=1 // pred_check
      _
    $region27: #{ngram_forward.1} parent=1 // pred_check_branch
      %47 = sbr.rel (0) target = $region29
    $region28: #{ngram_forward.1} parent=1 // pred_region
      %48 = dma.done [#allocation6], 1024
    $region29: #{ngram_forward.1} parent=1 // pred_fallthru
      _
    %v50 = vld [vmem:[%s0] sm:$0xff]
    %v51 = vld [vmem:[%s0 + $0x8] sm:$0xff]
    %v52 = vlaneseq
    %v53 = vand.u32 %v52, 127
    %54 = vset.pattern.permute.xlu0 0
    %55 = vperm.xlu0 %54, %v50
    %v56 = vpop.permute.xlu0 %55
    %57 = vset.pattern.permute.xlu0 0
    %58 = vperm.xlu0 %57, %v51
    %v59 = vpop.permute.xlu0 %58
    %vm60 = vcmp.eq.s32.totalorder %v53, %v56
    %vm61 = vcmp.eq.s32.totalorder %v53, %v59
    %v62 = vsel %vm60, 1, 0
    %v63 = vsel %vm61, 1, 0
    %v64 = vcvt.s32.f32 %v62
    %v65 = vcvt.s32.f32 %v63
    %v66 = vpack.c.bf16 %v65, %v64
    %v67 = vld [vmem:[#allocation2] sm:$0xf]
    %v68 = vld [vmem:[#allocation2 + $0x4] sm:$0xf]
    %v69 = vld [vmem:[#allocation2 + $0x8] sm:$0xf]
    %v70 = vld [vmem:[#allocation2 + $0xc] sm:$0xf]
    %v71 = vld [vmem:[#allocation2 + $0x10] sm:$0xf]
    %v72 = vld [vmem:[#allocation2 + $0x14] sm:$0xf]
    %v73 = vld [vmem:[#allocation2 + $0x18] sm:$0xf]
    %v74 = vld [vmem:[#allocation2 + $0x1c] sm:$0xf]
    %v75 = vld [vmem:[#allocation2 + $0x20] sm:$0xf]
    %v76 = vld [vmem:[#allocation2 + $0x24] sm:$0xf]
    %v77 = vld [vmem:[#allocation2 + $0x28] sm:$0xf]
    %v78 = vld [vmem:[#allocation2 + $0x2c] sm:$0xf]
    %v79 = vld [vmem:[#allocation2 + $0x30] sm:$0xf]
    %v80 = vld [vmem:[#allocation2 + $0x34] sm:$0xf]
    %v81 = vld [vmem:[#allocation2 + $0x38] sm:$0xf]
    %v82 = vld [vmem:[#allocation2 + $0x3c] sm:$0xf]
    %83 = vset.pattern.permute.xlu0 1
    %84 = vperm.xlu0 %83, %v50
    %v85 = vpop.permute.xlu0 %84
    %86 = vset.pattern.permute.xlu0 1
    %87 = vperm.xlu0 %86, %v51
    %v88 = vpop.permute.xlu0 %87
    %vm89 = vcmp.eq.s32.totalorder %v53, %v85
    %vm90 = vcmp.eq.s32.totalorder %v53, %v88
    %v91 = vsel %vm89, 1, 0
    %v92 = vsel %vm90, 1, 0
    %v93 = vcvt.s32.f32 %v91
    %v94 = vcvt.s32.f32 %v92
    %v95 = vpack.c.bf16 %v94, %v93
    %s96 = scalar_lea.vmem [#allocation2], 64
    %v97 = vld [vmem:[%s96] sm:$0xf]
    %v98 = vld [vmem:[%s96 + $0x4] sm:$0xf]
    %v99 = vld [vmem:[%s96 + $0x8] sm:$0xf]
    %v100 = vld [vmem:[%s96 + $0xc] sm:$0xf]
    %v101 = vld [vmem:[%s96 + $0x10] sm:$0xf]
    %v102 = vld [vmem:[%s96 + $0x14] sm:$0xf]
    %v103 = vld [vmem:[%s96 + $0x18] sm:$0xf]
    %v104 = vld [vmem:[%s96 + $0x1c] sm:$0xf]
    %v105 = vld [vmem:[%s96 + $0x20] sm:$0xf]
    %v106 = vld [vmem:[%s96 + $0x24] sm:$0xf]
    %v107 = vld [vmem:[%s96 + $0x28] sm:$0xf]
    %v108 = vld [vmem:[%s96 + $0x2c] sm:$0xf]
    %v109 = vld [vmem:[%s96 + $0x30] sm:$0xf]
    %v110 = vld [vmem:[%s96 + $0x34] sm:$0xf]
    %v111 = vld [vmem:[%s96 + $0x38] sm:$0xf]
    %v112 = vld [vmem:[%s96 + $0x3c] sm:$0xf]
    %v129 = vunpack.c.l.b16 %v97
    %v130 = vunpack.c.l.b16 %v98
    %v131 = vunpack.c.l.b16 %v99
    %v132 = vunpack.c.l.b16 %v100
    %v133 = vunpack.c.l.b16 %v101
    %v134 = vunpack.c.l.b16 %v102
    %v135 = vunpack.c.l.b16 %v103
    %v136 = vunpack.c.l.b16 %v104
    %v137 = vunpack.c.l.b16 %v105
    %v138 = vunpack.c.l.b16 %v106
    %v139 = vunpack.c.l.b16 %v107
    %v140 = vunpack.c.l.b16 %v108
    %v141 = vunpack.c.l.b16 %v109
    %v142 = vunpack.c.l.b16 %v110
    %v143 = vunpack.c.l.b16 %v111
    %v144 = vunpack.c.l.b16 %v112
    %v145 = vpack.c.b16 %v130, %v129
    %v146 = vpack.c.b16 %v132, %v131
    %v147 = vpack.c.b16 %v134, %v133
    %v148 = vpack.c.b16 %v136, %v135
    %v149 = vpack.c.b16 %v138, %v137
    %v150 = vpack.c.b16 %v140, %v139
    %v151 = vpack.c.b16 %v142, %v141
    %v152 = vpack.c.b16 %v144, %v143
    %161 = vmatprep.subr.bf16.mxu0 0
    %162 = vmatpush1.bf16.msra.mxu0 %v145
    %163 = vmatprep.subr.bf16.mxu0 0
    %164 = vmatpush1.bf16.msra.mxu0 %v146
    %165 = vmatprep.subr.bf16.mxu0 0
    %166 = vmatpush1.bf16.msra.mxu0 %v147
    %167 = vmatprep.subr.bf16.mxu0 0
    %168 = vmatpush1.bf16.msra.mxu0 %v148
    %169 = vmatprep.subr.bf16.mxu0 0
    %170 = vmatpush1.bf16.msra.mxu0 %v149
    %171 = vmatprep.subr.bf16.mxu0 0
    %172 = vmatpush1.bf16.msra.mxu0 %v150
    %173 = vmatprep.subr.bf16.mxu0 0
    %174 = vmatpush1.bf16.msra.mxu0 %v151
    %175 = vmatprep.subr.bf16.mxu0 0
    %176 = vmatpush1.bf16.msra.mxu0 %v152
    %177 = vmatprep.subr.bf16.mxu0 0
    %178 = vmatpush1.bf16.msra.mxu0 0
    %179 = vmatprep.subr.bf16.mxu0 0
    %180 = vmatpush1.bf16.msra.mxu0 0
    %181 = vmatprep.subr.bf16.mxu0 0
    %182 = vmatpush1.bf16.msra.mxu0 0
    %183 = vmatprep.subr.bf16.mxu0 0
    %184 = vmatpush1.bf16.msra.mxu0 0
    %185 = vmatprep.subr.bf16.mxu0 0
    %186 = vmatpush1.bf16.msra.mxu0 0
    %187 = vmatprep.subr.bf16.mxu0 0
    %188 = vmatpush1.bf16.msra.mxu0 0
    %189 = vmatprep.subr.bf16.mxu0 0
    %190 = vmatpush1.bf16.msra.mxu0 0
    %191 = vmatprep.subr.bf16.mxu0 0
    %192 = vmatpush1.bf16.msra.mxu0 0
    %193 = vmatprep.mubr.bf16.mxu0 0
    %194 = vmatmul.mubr.bf16.gmra.mrb[0].mxu0 %v95
    %v195 = vpop.f32.mrb[0].mxu0
    %v196 = vadd.f32 0.0, %v195
    %v197 = vpop.f32.mrb[0].mxu0
    %v198 = vpop.f32.mrb[0].mxu0
    %v199 = vadd.f32 0.0, %v198
    %v200 = vpop.f32.mrb[0].mxu0
    %201 = vdwg.mxu0
    %v218 = vunpack.c.l.b16 %v67
    %v219 = vunpack.c.l.b16 %v68
    %v220 = vunpack.c.l.b16 %v69
    %v221 = vunpack.c.l.b16 %v70
    %v222 = vunpack.c.l.b16 %v71
    %v223 = vunpack.c.l.b16 %v72
    %v224 = vunpack.c.l.b16 %v73
    %v225 = vunpack.c.l.b16 %v74
    %v226 = vunpack.c.l.b16 %v75
    %v227 = vunpack.c.l.b16 %v76
    %v228 = vunpack.c.l.b16 %v77
    %v229 = vunpack.c.l.b16 %v78
    %v230 = vunpack.c.l.b16 %v79
    %v231 = vunpack.c.l.b16 %v80
    %v232 = vunpack.c.l.b16 %v81
    %v233 = vunpack.c.l.b16 %v82
    %v234 = vpack.c.b16 %v219, %v218
    %v235 = vpack.c.b16 %v221, %v220
    %v236 = vpack.c.b16 %v223, %v222
    %v237 = vpack.c.b16 %v225, %v224
    %v238 = vpack.c.b16 %v227, %v226
    %v239 = vpack.c.b16 %v229, %v228
    %v240 = vpack.c.b16 %v231, %v230
    %v241 = vpack.c.b16 %v233, %v232
    %250 = vmatprep.subr.bf16.mxu0 0
    %251 = vmatpush1.bf16.msra.mxu0 %v234
    %252 = vmatprep.subr.bf16.mxu0 0
    %253 = vmatpush1.bf16.msra.mxu0 %v235
    %254 = vmatprep.subr.bf16.mxu0 0
    %255 = vmatpush1.bf16.msra.mxu0 %v236
    %256 = vmatprep.subr.bf16.mxu0 0
    %257 = vmatpush1.bf16.msra.mxu0 %v237
    %258 = vmatprep.subr.bf16.mxu0 0
    %259 = vmatpush1.bf16.msra.mxu0 %v238
    %260 = vmatprep.subr.bf16.mxu0 0
    %261 = vmatpush1.bf16.msra.mxu0 %v239
    %262 = vmatprep.subr.bf16.mxu0 0
    %263 = vmatpush1.bf16.msra.mxu0 %v240
    %264 = vmatprep.subr.bf16.mxu0 0
    %265 = vmatpush1.bf16.msra.mxu0 %v241
    %266 = vmatprep.subr.bf16.mxu0 0
    %267 = vmatpush1.bf16.msra.mxu0 0
    %268 = vmatprep.subr.bf16.mxu0 0
    %269 = vmatpush1.bf16.msra.mxu0 0
    %270 = vmatprep.subr.bf16.mxu0 0
    %271 = vmatpush1.bf16.msra.mxu0 0
    %272 = vmatprep.subr.bf16.mxu0 0
    %273 = vmatpush1.bf16.msra.mxu0 0
    %274 = vmatprep.subr.bf16.mxu0 0
    %275 = vmatpush1.bf16.msra.mxu0 0
    %276 = vmatprep.subr.bf16.mxu0 0
    %277 = vmatpush1.bf16.msra.mxu0 0
    %278 = vmatprep.subr.bf16.mxu0 0
    %279 = vmatpush1.bf16.msra.mxu0 0
    %280 = vmatprep.subr.bf16.mxu0 0
    %281 = vmatpush1.bf16.msra.mxu0 0
    %282 = vmatprep.mubr.bf16.mxu0 0
    %283 = vmatmul.mubr.bf16.gmra.mrb[0].mxu0 %v66
    %v284 = vpop.f32.mrb[0].mxu0
    %v285 = vadd.f32 %v196, %v284
    %v286 = vpop.f32.mrb[0].mxu0
    %v287 = vpop.f32.mrb[0].mxu0
    %v288 = vadd.f32 %v199, %v287
    %v289 = vpop.f32.mrb[0].mxu0
    %290 = vdwg.mxu0
    %v291 = vld [vmem:[%s2] sm:$0x1]
    %v293 = vlaneseq
    %v294 = vshrl.u32 %v293, 7
    %v295 = vsub.s32 0, %v294
    %v296 = vrot.slane %v291, %v295
    %v298 = vadd.f32 %v285, %v296
    %v299 = vadd.f32 %v288, %v296
    %v300 = vmax.f32 %v298, 0.0
    %v301 = vmax.f32 %v299, 0.0
    %v302 = vpack.c.bf16 %v301, %v300
    %v303 = vld [vmem:[#allocation5] sm:$0xf]
    %v304 = vld [vmem:[#allocation5 + $0x4] sm:$0xf]
    %v305 = vld [vmem:[#allocation5 + $0x8] sm:$0xf]
    %v306 = vld [vmem:[#allocation5 + $0xc] sm:$0xf]
    %v307 = vld [vmem:[#allocation5 + $0x10] sm:$0xf]
    %v308 = vld [vmem:[#allocation5 + $0x14] sm:$0xf]
    %v309 = vld [vmem:[#allocation5 + $0x18] sm:$0xf]
    %v310 = vld [vmem:[#allocation5 + $0x1c] sm:$0xf]
    %v311 = vld [vmem:[#allocation5 + $0x20] sm:$0xf]
    %v312 = vld [vmem:[#allocation5 + $0x24] sm:$0xf]
    %v313 = vld [vmem:[#allocation5 + $0x28] sm:$0xf]
    %v314 = vld [vmem:[#allocation5 + $0x2c] sm:$0xf]
    %v315 = vld [vmem:[#allocation5 + $0x30] sm:$0xf]
    %v316 = vld [vmem:[#allocation5 + $0x34] sm:$0xf]
    %v317 = vld [vmem:[#allocation5 + $0x38] sm:$0xf]
    %v318 = vld [vmem:[#allocation5 + $0x3c] sm:$0xf]
    %v319 = vld [vmem:[%s4] sm:$0x1]
    %v321 = vlaneseq
    %v322 = vshrl.u32 %v321, 7
    %v323 = vsub.s32 0, %v322
    %v324 = vrot.slane %v319, %v323
    %v342 = vunpack.c.l.b16 %v303
    %v343 = vunpack.c.l.b16 %v304
    %v344 = vunpack.c.l.b16 %v305
    %v345 = vunpack.c.l.b16 %v306
    %v346 = vunpack.c.l.b16 %v307
    %v347 = vunpack.c.l.b16 %v308
    %v348 = vunpack.c.l.b16 %v309
    %v349 = vunpack.c.l.b16 %v310
    %v350 = vunpack.c.l.b16 %v311
    %v351 = vunpack.c.l.b16 %v312
    %v352 = vunpack.c.l.b16 %v313
    %v353 = vunpack.c.l.b16 %v314
    %v354 = vunpack.c.l.b16 %v315
    %v355 = vunpack.c.l.b16 %v316
    %v356 = vunpack.c.l.b16 %v317
    %v357 = vunpack.c.l.b16 %v318
    %v358 = vpack.c.b16 %v343, %v342
    %v359 = vpack.c.b16 %v345, %v344
    %v360 = vpack.c.b16 %v347, %v346
    %v361 = vpack.c.b16 %v349, %v348
    %v362 = vpack.c.b16 %v351, %v350
    %v363 = vpack.c.b16 %v353, %v352
    %v364 = vpack.c.b16 %v355, %v354
    %v365 = vpack.c.b16 %v357, %v356
    %374 = vmatprep.subr.bf16.mxu0 0
    %375 = vmatpush1.bf16.msra.mxu0 %v358
    %376 = vmatprep.subr.bf16.mxu0 0
    %377 = vmatpush1.bf16.msra.mxu0 %v359
    %378 = vmatprep.subr.bf16.mxu0 0
    %379 = vmatpush1.bf16.msra.mxu0 %v360
    %380 = vmatprep.subr.bf16.mxu0 0
    %381 = vmatpush1.bf16.msra.mxu0 %v361
    %382 = vmatprep.subr.bf16.mxu0 0
    %383 = vmatpush1.bf16.msra.mxu0 %v362
    %384 = vmatprep.subr.bf16.mxu0 0
    %385 = vmatpush1.bf16.msra.mxu0 %v363
    %386 = vmatprep.subr.bf16.mxu0 0
    %387 = vmatpush1.bf16.msra.mxu0 %v364
    %388 = vmatprep.subr.bf16.mxu0 0
    %389 = vmatpush1.bf16.msra.mxu0 %v365
    %390 = vmatprep.subr.bf16.mxu0 0
    %391 = vmatpush1.bf16.msra.mxu0 0
    %392 = vmatprep.subr.bf16.mxu0 0
    %393 = vmatpush1.bf16.msra.mxu0 0
    %394 = vmatprep.subr.bf16.mxu0 0
    %395 = vmatpush1.bf16.msra.mxu0 0
    %396 = vmatprep.subr.bf16.mxu0 0
    %397 = vmatpush1.bf16.msra.mxu0 0
    %398 = vmatprep.subr.bf16.mxu0 0
    %399 = vmatpush1.bf16.msra.mxu0 0
    %400 = vmatprep.subr.bf16.mxu0 0
    %401 = vmatpush1.bf16.msra.mxu0 0
    %402 = vmatprep.subr.bf16.mxu0 0
    %403 = vmatpush1.bf16.msra.mxu0 0
    %404 = vmatprep.subr.bf16.mxu0 0
    %405 = vmatpush1.bf16.msra.mxu0 0
    %406 = vmatprep.mubr.bf16.mxu0 0
    %407 = vmatmul.mubr.bf16.gmra.mrb[0].mxu0 %v302
    %v408 = vpop.f32.mrb[0].mxu0
    %v409 = vadd.f32 %v324, %v408
    %v410 = vpop.f32.mrb[0].mxu0
    %v411 = vpop.f32.mrb[0].mxu0
    %v412 = vadd.f32 %v324, %v411
    %v413 = vpop.f32.mrb[0].mxu0
    %414 = vdwg.mxu0
    %415 = vmax.xlane.f32.xlu0 %v409
    %v416 = vpop.xlane.xlu0 %415
    %417 = vmax.xlane.f32.xlu0 %v412
    %v418 = vpop.xlane.xlu0 %417
    %v419 = vsub.f32 %v409, %v416
    %v420 = vsub.f32 %v412, %v418
    %v421 = vmul.f32 %v419, 1.442695
    %v422 = vpow.pop %v421
    %v423 = vmul.f32 %v420, 1.442695
    %v424 = vpow.pop %v423
    %425 = vadd.xlane.f32.xlu0 %v422
    %v426 = vpop.xlane.xlu0 %425
    %427 = vadd.xlane.f32.xlu0 %v424
    %v428 = vpop.xlane.xlu0 %427
    %v429 = vlog2.pop %v426
    %v430 = vmul.f32 %v429, 0.6931472
    %v431 = vlog2.pop %v428
    %v432 = vmul.f32 %v431, 0.6931472
    %v433 = vsub.f32 %v419, %v430
    %v434 = vsub.f32 %v420, %v432
    %435 = vst [vmem:[#allocation7] sm:$0xff] %v433
    %436 = vst [vmem:[#allocation7 + $0x8] sm:$0xff] %v434
    // Predicated region
    $region30: #{ngram_forward.1} parent=1 // pred_check
      _
    $region31: #{ngram_forward.1} parent=1 // pred_check_branch
      %438 = sbr.rel (0) target = $region33
    $region32: #{ngram_forward.1} parent=1 // pred_region
      %s440 = ssub.s32 256, 256
      %441 = vsyncadd [#allocation4], %s440
      %s442 = sshll.u32 [#allocation7], 4
      %s443 = int_to_ptr.vmem [resolvable:$true] %s442
      %448 = dma.vmem_to_hbm [thread:$0]  %s443, 256, %s5, [#allocation4], 128, 128, 8
    $region33: #{ngram_forward.1} parent=1 // pred_fallthru
      _
    // Predicated region
    $region34: #{ngram_forward.1} parent=1 // pred_check
      _
    $region35: #{ngram_forward.1} parent=1 // pred_check_branch
      %450 = sbr.rel (0) target = $region37
    $region36: #{ngram_forward.1} parent=1 // pred_region
      %451 = dma.done [#allocation4], 256
    $region37: #{ngram_forward.1} parent=1 // pred_fallthru
      _
    %452 = vsyncpa [#allocation3], 1
    %453 = vsyncpa [#allocation6], 1
    %454 = vsyncpa [#allocation4], 1

</llo_original>
